<compile_context>
chip_gen: v7x
topology: tpu7x:2x2x1
jax: 0.10.0
libtpu: 0.0.40
codegen_flags: <defaults>
</compile_context>

<pallas_src>
import functools

import jax
import jax.numpy as jnp
from jax.experimental import pallas as pl
from jax.experimental.pallas import tpu as pltpu


def metanet_kernel(x_ref, w1_ref, b1_ref, w2m_ref, b2m_ref, w2b_ref, b2b_ref,
                   mal_ref, bias_ref, *, compute_dtype):
    # First linear + ReLU.  MXU operands in compute_dtype (bf16 by default),
    # accumulation and bias add in f32.
    x = x_ref[...].astype(compute_dtype)
    h = jnp.dot(x, w1_ref[...], preferred_element_type=jnp.float32)
    h = jnp.maximum(h + b1_ref[...], 0.0)                          # (tb, M) f32
    hc = h.astype(compute_dtype)
    # Second linear, split per output so each store is lane-aligned / unmasked.
    mal = jnp.dot(hc, w2m_ref[...], preferred_element_type=jnp.float32) + b2m_ref[...]
    bias = jnp.dot(hc, w2b_ref[...], preferred_element_type=jnp.float32) + b2b_ref[...]
    mal_ref[...] = mal.astype(mal_ref.dtype)                       # (tb, D*D) lane-dense
    bias_ref[...] = bias.astype(bias_ref.dtype)                    # (tb, D)


def _num_tensorcores() -> int:
    """Best-effort TensorCore-per-device count (v7x: 2, v5e/v6e: 1)."""
    try:
        return max(1, int(getattr(jax.devices()[0], "num_cores", 1)))
    except Exception:
        return 1


def _choose_tile(B, tb, align, num_cores):
    """Pick (tb_eff, Bp) preferring: no padding, no post-call slice, big tiles."""
    tb = max(tb, align)
    if B <= tb:
        # Full-extent block(s): no (8,128) divisibility requirement, no padding.
        if num_cores > 1 and B % (num_cores * align) == 0 and B // num_cores >= align:
            return B // num_cores, B          # give every TensorCore a grid step
        return B, B
    Bp = pl.cdiv(B, align) * align
    # Largest multiple of `align` <= tb that divides Bp -> at most align-1 pad rows
    # and (when B % align == 0) no trailing slice copy at all.
    t = (tb // align) * align
    best = align
    while t >= align:
        if Bp % t == 0:
            best = t
            break
        t -= align
    if best * 4 >= min(tb, Bp):
        return best, Bp
    # Awkward factorization: fall back to a full-size tile + pad (accepts one extra
    # output pass for the trailing slice).
    tb_eff = (tb // align) * align
    return tb_eff, pl.cdiv(B, tb_eff) * tb_eff


def metanet_flat_v1(emb_fea, w1, b1, w2, b2, *, emb_dim, tb=4096,
                    out_dtype=jnp.bfloat16, compute_dtype=jnp.bfloat16,
                    num_cores=None):
    """emb_fea: (B, emb_dim).  Weights stored (in, out), i.e. transposed vs
    nn.Linear.weight.  Returns (mal_mat (B, D, D), bias_mat (B, D))."""
    B, D = emb_fea.shape
    assert D == emb_dim
    M = w1.shape[1]
    DD = emb_dim * emb_dim
    assert w2.shape == (M, DD + emb_dim)

    # ---- batch tiling ------------------------------------------------------
    out_bytes = jnp.dtype(out_dtype).itemsize
    align = 16 if out_bytes < 4 else 8        # packed row pairs for sub-32-bit outputs
    if num_cores is None:
        num_cores = _num_tensorcores()
    tb_eff, Bp = _choose_tile(B, tb, align, num_cores)
    x = emb_fea if Bp == B else jnp.pad(emb_fea, ((0, Bp - B), (0, 0)))
    grid = (Bp // tb_eff,)

    # ---- one-time weight prep (tiny, stays VMEM-resident across the grid) ---
    w1c = w1.astype(compute_dtype)
    w2_mal = w2[:, :DD].astype(compute_dtype)
    w2_bias = w2[:, DD:].astype(compute_dtype)
    b1_2d = b1.reshape(1, M).astype(jnp.float32)
    b2_mal = b2[:DD].reshape(1, DD).astype(jnp.float32)
    b2_bias = b2[DD:].reshape(1, emb_dim).astype(jnp.float32)

    w_bytes = jnp.dtype(compute_dtype).itemsize
    cost = pl.CostEstimate(
        flops=2 * Bp * D * M + 2 * Bp * M * (DD + D),
        transcendentals=0,
        bytes_accessed=(Bp * D * emb_fea.dtype.itemsize          # input
                        + (D * M + M * (DD + D)) * w_bytes       # weights
                        + (M + DD + D) * 4                       # biases
                        + Bp * (DD + D) * out_bytes),            # outputs (dominant)
    )

    kernel = functools.partial(metanet_kernel, compute_dtype=compute_dtype)
    mal_flat, bias_mat = pl.pallas_call(
        kernel,
        out_shape=(
            jax.ShapeDtypeStruct((Bp, DD), out_dtype),
            jax.ShapeDtypeStruct((Bp, emb_dim), out_dtype),
        ),
        grid=grid,
        in_specs=[
            pl.BlockSpec((tb_eff, D), lambda i: (i, 0)),   # emb_fea tile
            pl.BlockSpec((D, M), lambda i: (0, 0)),        # W1 (resident)
            pl.BlockSpec((1, M), lambda i: (0, 0)),        # b1
            pl.BlockSpec((M, DD), lambda i: (0, 0)),       # W2[:, :D*D]
            pl.BlockSpec((1, DD), lambda i: (0, 0)),       # b2[:D*D]
            pl.BlockSpec((M, D), lambda i: (0, 0)),        # W2[:, D*D:]
            pl.BlockSpec((1, D), lambda i: (0, 0)),        # b2[D*D:]
        ],
        out_specs=(
            pl.BlockSpec((tb_eff, DD), lambda i: (i, 0)),  # mal (lane-dense, 256)
            pl.BlockSpec((tb_eff, D), lambda i: (i, 0)),   # bias
        ),
        compiler_params=pltpu.CompilerParams(
            dimension_semantics=("parallel",),
        ),
        cost_estimate=cost,
    )(x, w1c, b1_2d, w2_mal, b2_mal, w2_bias, b2_bias)

    if Bp != B:
        mal_flat = mal_flat[:B]
        bias_mat = bias_mat[:B]
    mal_mat = mal_flat.reshape(-1, emb_dim, emb_dim)
    return mal_mat, bias_mat


def _ref(emb_fea, w1, b1, w2, b2, emb_dim):
    h = jnp.maximum(emb_fea @ w1 + b1, 0.0)
    o = h @ w2 + b2
    return (o[:, : emb_dim * emb_dim].reshape(-1, emb_dim, emb_dim),
            o[:, emb_dim * emb_dim:])


if __name__ == "__main__":
    emb_dim = 16
    meta_dim = 32
    batch = 256
    out_dim = emb_dim * (emb_dim + 1)

    key = jax.random.PRNGKey(0)
    k0, k1, k2, k3, k4 = jax.random.split(key, 5)

    # PyTorch Linear default init U(-1/sqrt(fan_in), 1/sqrt(fan_in)); weights (in, out).
    lim1 = 1.0 / jnp.sqrt(emb_dim)
    lim2 = 1.0 / jnp.sqrt(meta_dim)
    w1 = jax.random.uniform(k1, (emb_dim, meta_dim), jnp.float32, -lim1, lim1)
    b1 = jax.random.uniform(k2, (meta_dim,), jnp.float32, -lim1, lim1)
    w2 = jax.random.uniform(k3, (meta_dim, out_dim), jnp.float32, -lim2, lim2)
    b2 = jax.random.uniform(k4, (out_dim,), jnp.float32, -lim2, lim2)

    emb_fea = jax.random.normal(k0, (batch, emb_dim), jnp.float32)
    ref_mal, ref_bias = _ref(emb_fea, w1, b1, w2, b2, emb_dim)

    # --- default fast path: bf16 MXU operands + bf16 outputs, single big tile ---
    run_fast = jax.jit(functools.partial(metanet_flat_v1, emb_dim=emb_dim))
    mal_mat, bias_mat = run_fast(emb_fea, w1, b1, w2, b2)
    jax.block_until_ready((mal_mat, bias_mat))
    assert mal_mat.shape == (batch, emb_dim, emb_dim)
    assert bias_mat.shape == (batch, emb_dim)
    assert jnp.allclose(mal_mat.astype(jnp.float32), ref_mal, atol=3e-2, rtol=3e-2)
    assert jnp.allclose(bias_mat.astype(jnp.float32), ref_bias, atol=3e-2, rtol=3e-2)

    # --- f32 path with a multi-step grid (exercises tiling) for tight checking ---
    run_f32 = jax.jit(functools.partial(
        metanet_flat_v1, emb_dim=emb_dim, tb=64,
        out_dtype=jnp.float32, compute_dtype=jnp.float32))
    mal32, bias32 = run_f32(emb_fea, w1, b1, w2, b2)
    jax.block_until_ready((mal32, bias32))
    assert jnp.allclose(mal32, ref_mal, atol=1e-5, rtol=1e-5)
    assert jnp.allclose(bias32, ref_bias, atol=1e-5, rtol=1e-5)

    print("KERNEL_OK")
</pallas_src>

<mosaic_0001>
module attributes {stable_mosaic.version = 11 : i64} {
  func.func @metanet_kernel(%arg0: i32, %arg1: memref<256x16xf32, #tpu.memory_space<vmem>>, %arg2: memref<16x32xbf16, #tpu.memory_space<vmem>>, %arg3: memref<1x32xf32, #tpu.memory_space<vmem>>, %arg4: memref<32x256xbf16, #tpu.memory_space<vmem>>, %arg5: memref<1x256xf32, #tpu.memory_space<vmem>>, %arg6: memref<32x16xbf16, #tpu.memory_space<vmem>>, %arg7: memref<1x16xf32, #tpu.memory_space<vmem>>, %arg8: memref<256x256xbf16, #tpu.memory_space<vmem>>, %arg9: memref<256x16xbf16, #tpu.memory_space<vmem>>) attributes {dimension_semantics = [#tpu.dimension_semantics<parallel>], iteration_bounds = array<i64: 1>, scalar_prefetch = 0 : i64, scratch_operands = 0 : i64, tpu.core_type = #tpu.core_type<tc>, window_params = [{transform_indices = @transform_0, window_bounds = array<i64: 256, 16>}, {pipeline_mode = #tpu.pipeline_mode<synchronous>, transform_indices = @transform_1, window_bounds = array<i64: 16, 32>}, {pipeline_mode = #tpu.pipeline_mode<synchronous>, transform_indices = @transform_2, window_bounds = array<i64: 1, 32>}, {pipeline_mode = #tpu.pipeline_mode<synchronous>, transform_indices = @transform_3, window_bounds = array<i64: 32, 256>}, {pipeline_mode = #tpu.pipeline_mode<synchronous>, transform_indices = @transform_4, window_bounds = array<i64: 1, 256>}, {pipeline_mode = #tpu.pipeline_mode<synchronous>, transform_indices = @transform_5, window_bounds = array<i64: 32, 16>}, {pipeline_mode = #tpu.pipeline_mode<synchronous>, transform_indices = @transform_6, window_bounds = array<i64: 1, 16>}, {transform_indices = @transform_7, window_bounds = array<i64: 256, 256>}, {transform_indices = @transform_8, window_bounds = array<i64: 256, 16>}]} {
    %c0 = arith.constant 0 : index
    %c0_0 = arith.constant 0 : index
    %0 = vector.load %arg1[%c0, %c0_0] : memref<256x16xf32, #tpu.memory_space<vmem>>, vector<256x16xf32>
    %1 = arith.truncf %0 : vector<256x16xf32> to vector<256x16xbf16>
    %c0_1 = arith.constant 0 : index
    %c0_2 = arith.constant 0 : index
    %2 = vector.load %arg2[%c0_1, %c0_2] : memref<16x32xbf16, #tpu.memory_space<vmem>>, vector<16x32xbf16>
    %cst = arith.constant dense<0.000000e+00> : vector<256x32xf32>
    %3 = tpu.matmul %1, %2, %cst {dimension_numbers = #tpu.dot_dimension_numbers<[1], [0], [0], [1], [0, 0, 1, 1], [], []>} : vector<256x16xbf16>, vector<16x32xbf16>, vector<256x32xf32> -> vector<256x32xf32>
    %c0_3 = arith.constant 0 : index
    %c0_4 = arith.constant 0 : index
    %4 = vector.load %arg3[%c0_3, %c0_4] : memref<1x32xf32, #tpu.memory_space<vmem>>, vector<1x32xf32>
    %5 = vector.broadcast %4 : vector<1x32xf32> to vector<256x32xf32>
    %6 = arith.addf %3, %5 : vector<256x32xf32>
    %cst_5 = arith.constant 0.000000e+00 : f32
    %7 = vector.broadcast %cst_5 : f32 to vector<256x32xf32>
    %8 = arith.maximumf %6, %7 : vector<256x32xf32>
    %9 = arith.truncf %8 : vector<256x32xf32> to vector<256x32xbf16>
    %c0_6 = arith.constant 0 : index
    %c0_7 = arith.constant 0 : index
    %10 = vector.load %arg4[%c0_6, %c0_7] : memref<32x256xbf16, #tpu.memory_space<vmem>>, vector<32x256xbf16>
    %cst_8 = arith.constant dense<0.000000e+00> : vector<256x256xf32>
    %11 = tpu.matmul %9, %10, %cst_8 {dimension_numbers = #tpu.dot_dimension_numbers<[1], [0], [0], [1], [0, 0, 1, 1], [], []>} : vector<256x32xbf16>, vector<32x256xbf16>, vector<256x256xf32> -> vector<256x256xf32>
    %c0_9 = arith.constant 0 : index
    %c0_10 = arith.constant 0 : index
    %12 = vector.load %arg5[%c0_9, %c0_10] : memref<1x256xf32, #tpu.memory_space<vmem>>, vector<1x256xf32>
    %13 = vector.broadcast %12 : vector<1x256xf32> to vector<256x256xf32>
    %14 = arith.addf %11, %13 : vector<256x256xf32>
    %c0_11 = arith.constant 0 : index
    %c0_12 = arith.constant 0 : index
    %15 = vector.load %arg6[%c0_11, %c0_12] : memref<32x16xbf16, #tpu.memory_space<vmem>>, vector<32x16xbf16>
    %cst_13 = arith.constant dense<0.000000e+00> : vector<256x16xf32>
    %16 = tpu.matmul %9, %15, %cst_13 {dimension_numbers = #tpu.dot_dimension_numbers<[1], [0], [0], [1], [0, 0, 1, 1], [], []>} : vector<256x32xbf16>, vector<32x16xbf16>, vector<256x16xf32> -> vector<256x16xf32>
    %c0_14 = arith.constant 0 : index
    %c0_15 = arith.constant 0 : index
    %17 = vector.load %arg7[%c0_14, %c0_15] : memref<1x16xf32, #tpu.memory_space<vmem>>, vector<1x16xf32>
    %18 = vector.broadcast %17 : vector<1x16xf32> to vector<256x16xf32>
    %19 = arith.addf %16, %18 : vector<256x16xf32>
    %20 = arith.truncf %14 : vector<256x256xf32> to vector<256x256xbf16>
    %c0_16 = arith.constant 0 : index
    %c0_17 = arith.constant 0 : index
    %21 = vector.load %arg8[%c0_16, %c0_17] : memref<256x256xbf16, #tpu.memory_space<vmem>>, vector<256x256xbf16>
    tpu.vector_store %arg8[%c0_16, %c0_17], %20 {strides = array<i32>} : memref<256x256xbf16, #tpu.memory_space<vmem>>, vector<256x256xbf16>,
    %22 = arith.truncf %19 : vector<256x16xf32> to vector<256x16xbf16>
    %c0_18 = arith.constant 0 : index
    %c0_19 = arith.constant 0 : index
    %23 = vector.load %arg9[%c0_18, %c0_19] : memref<256x16xbf16, #tpu.memory_space<vmem>>, vector<256x16xbf16>
    tpu.vector_store %arg9[%c0_18, %c0_19], %22 {strides = array<i32>} : memref<256x16xbf16, #tpu.memory_space<vmem>>, vector<256x16xbf16>,
    return
  }
  func.func @transform_0(%arg0: i32) -> (i32, i32) {
    %c0_i32 = arith.constant 0 : i32
    %c0_i32_0 = arith.constant 0 : i32
    return %arg0, %c0_i32 : i32, i32
  }
  func.func @transform_1(%arg0: i32) -> (i32, i32) {
    %c0_i32 = arith.constant 0 : i32
    %c0_i32_0 = arith.constant 0 : i32
    %c0_i32_1 = arith.constant 0 : i32
    return %c0_i32, %c0_i32_0 : i32, i32
  }
  func.func @transform_2(%arg0: i32) -> (i32, i32) {
    %c0_i32 = arith.constant 0 : i32
    %c0_i32_0 = arith.constant 0 : i32
    %c0_i32_1 = arith.constant 0 : i32
    return %c0_i32, %c0_i32_0 : i32, i32
  }
  func.func @transform_3(%arg0: i32) -> (i32, i32) {
    %c0_i32 = arith.constant 0 : i32
    %c0_i32_0 = arith.constant 0 : i32
    %c0_i32_1 = arith.constant 0 : i32
    return %c0_i32, %c0_i32_0 : i32, i32
  }
  func.func @transform_4(%arg0: i32) -> (i32, i32) {
    %c0_i32 = arith.constant 0 : i32
    %c0_i32_0 = arith.constant 0 : i32
    %c0_i32_1 = arith.constant 0 : i32
    return %c0_i32, %c0_i32_0 : i32, i32
  }
  func.func @transform_5(%arg0: i32) -> (i32, i32) {
    %c0_i32 = arith.constant 0 : i32
    %c0_i32_0 = arith.constant 0 : i32
    %c0_i32_1 = arith.constant 0 : i32
    return %c0_i32, %c0_i32_0 : i32, i32
  }
  func.func @transform_6(%arg0: i32) -> (i32, i32) {
    %c0_i32 = arith.constant 0 : i32
    %c0_i32_0 = arith.constant 0 : i32
    %c0_i32_1 = arith.constant 0 : i32
    return %c0_i32, %c0_i32_0 : i32, i32
  }
  func.func @transform_7(%arg0: i32) -> (i32, i32) {
    %c0_i32 = arith.constant 0 : i32
    %c0_i32_0 = arith.constant 0 : i32
    return %arg0, %c0_i32 : i32, i32
  }
  func.func @transform_8(%arg0: i32) -> (i32, i32) {
    %c0_i32 = arith.constant 0 : i32
    %c0_i32_0 = arith.constant 0 : i32
    return %arg0, %c0_i32 : i32, i32
  }
}

</mosaic_0001>

<llo_original>
// kernel: metanet_flat_v1.1
$region0: #{metanet_flat_v1.1}
  #allocation0 [shape = 'u32[]', space=smem, size = 0x4, offset = 0x4, fixed_abs, tag = 'smem constant byte address 0x4 - core index']
  #allocation1 [shape = 'u32[144,128]{1,0:T(1,128)}', space=vmem, size = 0x12000, scoped, tag = 'internal scratch']
  %s0 = inlined_call_operand.vmem [shape: f32[256,16], index: 0, kind: input, shape index: {}]
  %s1 = inlined_call_operand.vmem [shape: bf16[16,32], index: 1, kind: input, shape index: {}]
  %s2 = inlined_call_operand.vmem [shape: f32[1,32], index: 2, kind: input, shape index: {}]
  %s3 = inlined_call_operand.vmem [shape: bf16[32,256], index: 3, kind: input, shape index: {}]
  %s4 = inlined_call_operand.vmem [shape: f32[1,256], index: 4, kind: input, shape index: {}]
  %s5 = inlined_call_operand.vmem [shape: bf16[32,16], index: 5, kind: input, shape index: {}]
  %s6 = inlined_call_operand.vmem [shape: f32[1,16], index: 6, kind: input, shape index: {}]
  %s7 = inlined_call_operand.vmem [shape: bf16[256,256], index: 7, kind: output, shape index: {0}]
  %s8 = inlined_call_operand.vmem [shape: bf16[256,16], index: 8, kind: output, shape index: {1}]
  %9 = xla_tuple %s7, %s8
  %s10 = sld [smem:[#allocation0]]
  $region46: #{metanet_flat_v1.1} parent=0
    _
  %s12 = ssub.s32 1, %s10
  %s13 = scalar_select 0, %s12, %s10
  // Predicated region
  $region2: #{metanet_flat_v1.1} parent=0 // pred_check
    _
  $region3: #{metanet_flat_v1.1} parent=0 // pred_check_branch
    %15 = sbr.rel (0) target = $region5
  $region4: #{metanet_flat_v1.1} parent=0 // pred_region
    _
  $region5: #{metanet_flat_v1.1} parent=0 // pred_fallthru
    _
  // Predicated region
  $region6: #{metanet_flat_v1.1} parent=0 // pred_check
    _
  $region7: #{metanet_flat_v1.1} parent=0 // pred_check_branch
    %17 = sbr.rel (0) target = $region9
  $region8: #{metanet_flat_v1.1} parent=0 // pred_region
    _
  $region9: #{metanet_flat_v1.1} parent=0 // pred_fallthru
    _
  // Predicated region
  $region10: #{metanet_flat_v1.1} parent=0 // pred_check
    _
  $region11: #{metanet_flat_v1.1} parent=0 // pred_check_branch
    %19 = sbr.rel (0) target = $region13
  $region12: #{metanet_flat_v1.1} parent=0 // pred_region
    _
  $region13: #{metanet_flat_v1.1} parent=0 // pred_fallthru
    _
  // Predicated region
  $region14: #{metanet_flat_v1.1} parent=0 // pred_check
    _
  $region15: #{metanet_flat_v1.1} parent=0 // pred_check_branch
    %21 = sbr.rel (0) target = $region17
  $region16: #{metanet_flat_v1.1} parent=0 // pred_region
    _
  $region17: #{metanet_flat_v1.1} parent=0 // pred_fallthru
    _
  // Predicated region
  $region18: #{metanet_flat_v1.1} parent=0 // pred_check
    _
  $region19: #{metanet_flat_v1.1} parent=0 // pred_check_branch
    %23 = sbr.rel (0) target = $region21
  $region20: #{metanet_flat_v1.1} parent=0 // pred_region
    _
  $region21: #{metanet_flat_v1.1} parent=0 // pred_fallthru
    _
  // Predicated region
  $region22: #{metanet_flat_v1.1} parent=0 // pred_check
    _
  $region23: #{metanet_flat_v1.1} parent=0 // pred_check_branch
    %25 = sbr.rel (0) target = $region25
  $region24: #{metanet_flat_v1.1} parent=0 // pred_region
    _
  $region25: #{metanet_flat_v1.1} parent=0 // pred_fallthru
    _
  // Predicated region
  $region26: #{metanet_flat_v1.1} parent=0 // pred_check
    _
  $region27: #{metanet_flat_v1.1} parent=0 // pred_check_branch
    %27 = sbr.rel (0) target = $region29
  $region28: #{metanet_flat_v1.1} parent=0 // pred_region
    _
  $region29: #{metanet_flat_v1.1} parent=0 // pred_fallthru
    _
  %v29 = vld [vmem:[%s0] sm:$0xff]
  %v30 = vld [vmem:[%s0 + $0x8] sm:$0xff]
  %v31 = vld [vmem:[%s0 + $0x10] sm:$0xff]
  %v32 = vld [vmem:[%s0 + $0x18] sm:$0xff]
  %v33 = vld [vmem:[%s0 + $0x20] sm:$0xff]
  %v34 = vld [vmem:[%s0 + $0x28] sm:$0xff]
  %v35 = vld [vmem:[%s0 + $0x30] sm:$0xff]
  %v36 = vld [vmem:[%s0 + $0x38] sm:$0xff]
  %v37 = vld [vmem:[%s0 + $0x40] sm:$0xff]
  %v38 = vld [vmem:[%s0 + $0x48] sm:$0xff]
  %v39 = vld [vmem:[%s0 + $0x50] sm:$0xff]
  %v40 = vld [vmem:[%s0 + $0x58] sm:$0xff]
  %v41 = vld [vmem:[%s0 + $0x60] sm:$0xff]
  %v42 = vld [vmem:[%s0 + $0x68] sm:$0xff]
  %v43 = vld [vmem:[%s0 + $0x70] sm:$0xff]
  %v44 = vld [vmem:[%s0 + $0x78] sm:$0xff]
  %v45 = vld [vmem:[%s0 + $0x80] sm:$0xff]
  %v46 = vld [vmem:[%s0 + $0x88] sm:$0xff]
  %v47 = vld [vmem:[%s0 + $0x90] sm:$0xff]
  %v48 = vld [vmem:[%s0 + $0x98] sm:$0xff]
  %v49 = vld [vmem:[%s0 + $0xa0] sm:$0xff]
  %v50 = vld [vmem:[%s0 + $0xa8] sm:$0xff]
  %v51 = vld [vmem:[%s0 + $0xb0] sm:$0xff]
  %v52 = vld [vmem:[%s0 + $0xb8] sm:$0xff]
  %v53 = vld [vmem:[%s0 + $0xc0] sm:$0xff]
  %v54 = vld [vmem:[%s0 + $0xc8] sm:$0xff]
  %v55 = vld [vmem:[%s0 + $0xd0] sm:$0xff]
  %v56 = vld [vmem:[%s0 + $0xd8] sm:$0xff]
  %v57 = vld [vmem:[%s0 + $0xe0] sm:$0xff]
  %v58 = vld [vmem:[%s0 + $0xe8] sm:$0xff]
  %v59 = vld [vmem:[%s0 + $0xf0] sm:$0xff]
  %v60 = vld [vmem:[%s0 + $0xf8] sm:$0xff]
  %v61 = vpack.c.bf16 %v30, %v29
  %v62 = vpack.c.bf16 %v32, %v31
  %v63 = vpack.c.bf16 %v34, %v33
  %v64 = vpack.c.bf16 %v36, %v35
  %v65 = vpack.c.bf16 %v38, %v37
  %v66 = vpack.c.bf16 %v40, %v39
  %v67 = vpack.c.bf16 %v42, %v41
  %v68 = vpack.c.bf16 %v44, %v43
  %v69 = vpack.c.bf16 %v46, %v45
  %v70 = vpack.c.bf16 %v48, %v47
  %v71 = vpack.c.bf16 %v50, %v49
  %v72 = vpack.c.bf16 %v52, %v51
  %v73 = vpack.c.bf16 %v54, %v53
  %v74 = vpack.c.bf16 %v56, %v55
  %v75 = vpack.c.bf16 %v58, %v57
  %v76 = vpack.c.bf16 %v60, %v59
  %v77 = vld [vmem:[%s1] sm:$0xf]
  %v78 = vld [vmem:[%s1 + $0x4] sm:$0xf]
  %v79 = vld [vmem:[%s2] sm:$0x1]
  %v81 = vlaneseq
  %v82 = vshrl.u32 %v81, 7
  %v83 = vsub.s32 0, %v82
  %v84 = vrot.slane %v79, %v83
  %v88 = vunpack.c.l.b16 %v77
  %v89 = vunpack.c.l.b16 %v78
  %v90 = vpack.c.b16 %v89, %v88
  %vm92 = vcmask 130048
  %v94 = vsel %vm92, %v61, 0
  %v97 = vsel %vm92, %v62, 0
  %v100 = vsel %vm92, %v63, 0
  %v103 = vsel %vm92, %v64, 0
  %v106 = vsel %vm92, %v65, 0
  %v109 = vsel %vm92, %v66, 0
  %v112 = vsel %vm92, %v67, 0
  %v115 = vsel %vm92, %v68, 0
  %v118 = vsel %vm92, %v69, 0
  %v121 = vsel %vm92, %v70, 0
  %v124 = vsel %vm92, %v71, 0
  %v127 = vsel %vm92, %v72, 0
  %v130 = vsel %vm92, %v73, 0
  %v133 = vsel %vm92, %v74, 0
  %v136 = vsel %vm92, %v75, 0
  %v139 = vsel %vm92, %v76, 0
  %141 = vmatprep.subr.bf16.mxu0 0
  %142 = vmatpush1.bf16.msra.mxu0 %v90
  %143 = vmatprep.subr.bf16.mxu0 0
  %144 = vmatpush1.bf16.msra.mxu0 0
  %145 = vmatprep.subr.bf16.mxu0 0
  %146 = vmatpush1.bf16.msra.mxu0 0
  %147 = vmatprep.subr.bf16.mxu0 0
  %148 = vmatpush1.bf16.msra.mxu0 0
  %149 = vmatprep.subr.bf16.mxu0 0
  %150 = vmatpush1.bf16.msra.mxu0 0
  %151 = vmatprep.subr.bf16.mxu0 0
  %152 = vmatpush1.bf16.msra.mxu0 0
  %153 = vmatprep.subr.bf16.mxu0 0
  %154 = vmatpush1.bf16.msra.mxu0 0
  %155 = vmatprep.subr.bf16.mxu0 0
  %156 = vmatpush1.bf16.msra.mxu0 0
  %157 = vmatprep.subr.bf16.mxu0 0
  %158 = vmatpush1.bf16.msra.mxu0 0
  %159 = vmatprep.subr.bf16.mxu0 0
  %160 = vmatpush1.bf16.msra.mxu0 0
  %161 = vmatprep.subr.bf16.mxu0 0
  %162 = vmatpush1.bf16.msra.mxu0 0
  %163 = vmatprep.subr.bf16.mxu0 0
  %164 = vmatpush1.bf16.msra.mxu0 0
  %165 = vmatprep.subr.bf16.mxu0 0
  %166 = vmatpush1.bf16.msra.mxu0 0
  %167 = vmatprep.subr.bf16.mxu0 0
  %168 = vmatpush1.bf16.msra.mxu0 0
  %169 = vmatprep.subr.bf16.mxu0 0
  %170 = vmatpush1.bf16.msra.mxu0 0
  %171 = vmatprep.subr.bf16.mxu0 0
  %172 = vmatpush1.bf16.msra.mxu0 0
  %173 = vmatprep.mubr.bf16.mxu0 0
  %174 = vmatmul.mubr.bf16.gmra.mrb[0].mxu0 %v94
  %v175 = vpop.f32.mrb[0].mxu0
  %v176 = vadd.f32 %v84, %v175
  %v177 = vpop.f32.mrb[0].mxu0
  %v178 = vpop.f32.mrb[0].mxu0
  %v179 = vadd.f32 %v84, %v178
  %v180 = vpop.f32.mrb[0].mxu0
  %181 = vmatprep.mubr.bf16.mxu0 0
  %182 = vmatmul.mubr.bf16.gmra.mrb[0].mxu0 %v97
  %v183 = vpop.f32.mrb[0].mxu0
  %v184 = vadd.f32 %v84, %v183
  %v185 = vpop.f32.mrb[0].mxu0
  %v186 = vpop.f32.mrb[0].mxu0
  %v187 = vadd.f32 %v84, %v186
  %v188 = vpop.f32.mrb[0].mxu0
  %189 = vmatprep.mubr.bf16.mxu0 0
  %190 = vmatmul.mubr.bf16.gmra.mrb[0].mxu0 %v100
  %v191 = vpop.f32.mrb[0].mxu0
  %v192 = vadd.f32 %v84, %v191
  %v193 = vpop.f32.mrb[0].mxu0
  %v194 = vpop.f32.mrb[0].mxu0
  %v195 = vadd.f32 %v84, %v194
  %v196 = vpop.f32.mrb[0].mxu0
  %197 = vmatprep.mubr.bf16.mxu0 0
  %198 = vmatmul.mubr.bf16.gmra.mrb[0].mxu0 %v103
  %v199 = vpop.f32.mrb[0].mxu0
  %v200 = vadd.f32 %v84, %v199
  %v201 = vpop.f32.mrb[0].mxu0
  %v202 = vpop.f32.mrb[0].mxu0
  %v203 = vadd.f32 %v84, %v202
  %v204 = vpop.f32.mrb[0].mxu0
  %205 = vmatprep.mubr.bf16.mxu0 0
  %206 = vmatmul.mubr.bf16.gmra.mrb[0].mxu0 %v106
  %v207 = vpop.f32.mrb[0].mxu0
  %v208 = vadd.f32 %v84, %v207
  %v209 = vpop.f32.mrb[0].mxu0
  %v210 = vpop.f32.mrb[0].mxu0
  %v211 = vadd.f32 %v84, %v210
  %v212 = vpop.f32.mrb[0].mxu0
  %213 = vmatprep.mubr.bf16.mxu0 0
  %214 = vmatmul.mubr.bf16.gmra.mrb[0].mxu0 %v109
  %v215 = vpop.f32.mrb[0].mxu0
  %v216 = vadd.f32 %v84, %v215
  %v217 = vpop.f32.mrb[0].mxu0
  %v218 = vpop.f32.mrb[0].mxu0
  %v219 = vadd.f32 %v84, %v218
  %v220 = vpop.f32.mrb[0].mxu0
  %221 = vmatprep.mubr.bf16.mxu0 0
  %222 = vmatmul.mubr.bf16.gmra.mrb[0].mxu0 %v112
  %v223 = vpop.f32.mrb[0].mxu0
  %v224 = vadd.f32 %v84, %v223
  %v225 = vpop.f32.mrb[0].mxu0
  %v226 = vpop.f32.mrb[0].mxu0
  %v227 = vadd.f32 %v84, %v226
  %v228 = vpop.f32.mrb[0].mxu0
  %229 = vmatprep.mubr.bf16.mxu0 0
  %230 = vmatmul.mubr.bf16.gmra.mrb[0].mxu0 %v115
  %v231 = vpop.f32.mrb[0].mxu0
  %v232 = vadd.f32 %v84, %v231
  %v233 = vpop.f32.mrb[0].mxu0
  %v234 = vpop.f32.mrb[0].mxu0
  %v235 = vadd.f32 %v84, %v234
  %v236 = vpop.f32.mrb[0].mxu0
  %237 = vmatprep.mubr.bf16.mxu0 0
  %238 = vmatmul.mubr.bf16.gmra.mrb[0].mxu0 %v118
  %v239 = vpop.f32.mrb[0].mxu0
  %v240 = vadd.f32 %v84, %v239
  %v241 = vpop.f32.mrb[0].mxu0
  %v242 = vpop.f32.mrb[0].mxu0
  %v243 = vadd.f32 %v84, %v242
  %v244 = vpop.f32.mrb[0].mxu0
  %245 = vmatprep.mubr.bf16.mxu0 0
  %246 = vmatmul.mubr.bf16.gmra.mrb[0].mxu0 %v121
  %v247 = vpop.f32.mrb[0].mxu0
  %v248 = vadd.f32 %v84, %v247
  %v249 = vpop.f32.mrb[0].mxu0
  %v250 = vpop.f32.mrb[0].mxu0
  %v251 = vadd.f32 %v84, %v250
  %v252 = vpop.f32.mrb[0].mxu0
  %253 = vmatprep.mubr.bf16.mxu0 0
  %254 = vmatmul.mubr.bf16.gmra.mrb[0].mxu0 %v124
  %v255 = vpop.f32.mrb[0].mxu0
  %v256 = vadd.f32 %v84, %v255
  %v257 = vpop.f32.mrb[0].mxu0
  %v258 = vpop.f32.mrb[0].mxu0
  %v259 = vadd.f32 %v84, %v258
  %v260 = vpop.f32.mrb[0].mxu0
  %261 = vmatprep.mubr.bf16.mxu0 0
  %262 = vmatmul.mubr.bf16.gmra.mrb[0].mxu0 %v127
  %v263 = vpop.f32.mrb[0].mxu0
  %v264 = vadd.f32 %v84, %v263
  %v265 = vpop.f32.mrb[0].mxu0
  %v266 = vpop.f32.mrb[0].mxu0
  %v267 = vadd.f32 %v84, %v266
  %v268 = vpop.f32.mrb[0].mxu0
  %269 = vmatprep.mubr.bf16.mxu0 0
  %270 = vmatmul.mubr.bf16.gmra.mrb[0].mxu0 %v130
  %v271 = vpop.f32.mrb[0].mxu0
  %v272 = vadd.f32 %v84, %v271
  %v273 = vpop.f32.mrb[0].mxu0
  %v274 = vpop.f32.mrb[0].mxu0
  %v275 = vadd.f32 %v84, %v274
  %v276 = vpop.f32.mrb[0].mxu0
  %277 = vmatprep.mubr.bf16.mxu0 0
  %278 = vmatmul.mubr.bf16.gmra.mrb[0].mxu0 %v133
  %v279 = vpop.f32.mrb[0].mxu0
  %v280 = vadd.f32 %v84, %v279
  %v281 = vpop.f32.mrb[0].mxu0
  %v282 = vpop.f32.mrb[0].mxu0
  %v283 = vadd.f32 %v84, %v282
  %v284 = vpop.f32.mrb[0].mxu0
  %285 = vmatprep.mubr.bf16.mxu0 0
  %286 = vmatmul.mubr.bf16.gmra.mrb[0].mxu0 %v136
  %v287 = vpop.f32.mrb[0].mxu0
  %v288 = vadd.f32 %v84, %v287
  %v289 = vpop.f32.mrb[0].mxu0
  %v290 = vpop.f32.mrb[0].mxu0
  %v291 = vadd.f32 %v84, %v290
  %v292 = vpop.f32.mrb[0].mxu0
  %293 = vmatprep.mubr.bf16.mxu0 0
  %294 = vmatmul.mubr.bf16.gmra.mrb[0].mxu0 %v139
  %v295 = vpop.f32.mrb[0].mxu0
  %v296 = vadd.f32 %v84, %v295
  %v297 = vpop.f32.mrb[0].mxu0
  %v298 = vpop.f32.mrb[0].mxu0
  %v299 = vadd.f32 %v84, %v298
  %v300 = vpop.f32.mrb[0].mxu0
  %301 = vdwg.mxu0
  %v302 = vmax.f32 %v176, 0.0
  %v303 = vmax.f32 %v179, 0.0
  %v304 = vmax.f32 %v184, 0.0
  %v305 = vmax.f32 %v187, 0.0
  %v306 = vmax.f32 %v192, 0.0
  %v307 = vmax.f32 %v195, 0.0
  %v308 = vmax.f32 %v200, 0.0
  %v309 = vmax.f32 %v203, 0.0
  %v310 = vmax.f32 %v208, 0.0
  %v311 = vmax.f32 %v211, 0.0
  %v312 = vmax.f32 %v216, 0.0
  %v313 = vmax.f32 %v219, 0.0
  %v314 = vmax.f32 %v224, 0.0
  %v315 = vmax.f32 %v227, 0.0
  %v316 = vmax.f32 %v232, 0.0
  %v317 = vmax.f32 %v235, 0.0
  %v318 = vmax.f32 %v240, 0.0
  %v319 = vmax.f32 %v243, 0.0
  %v320 = vmax.f32 %v248, 0.0
  %v321 = vmax.f32 %v251, 0.0
  %v322 = vmax.f32 %v256, 0.0
  %v323 = vmax.f32 %v259, 0.0
  %v324 = vmax.f32 %v264, 0.0
  %v325 = vmax.f32 %v267, 0.0
  %v326 = vmax.f32 %v272, 0.0
  %v327 = vmax.f32 %v275, 0.0
  %v328 = vmax.f32 %v280, 0.0
  %v329 = vmax.f32 %v283, 0.0
  %v330 = vmax.f32 %v288, 0.0
  %v331 = vmax.f32 %v291, 0.0
  %v332 = vmax.f32 %v296, 0.0
  %v333 = vmax.f32 %v299, 0.0
  %v334 = vpack.c.bf16 %v303, %v302
  %v335 = vpack.c.bf16 %v305, %v304
  %v336 = vpack.c.bf16 %v307, %v306
  %v337 = vpack.c.bf16 %v309, %v308
  %v338 = vpack.c.bf16 %v311, %v310
  %v339 = vpack.c.bf16 %v313, %v312
  %v340 = vpack.c.bf16 %v315, %v314
  %v341 = vpack.c.bf16 %v317, %v316
  %v342 = vpack.c.bf16 %v319, %v318
  %v343 = vpack.c.bf16 %v321, %v320
  %v344 = vpack.c.bf16 %v323, %v322
  %v345 = vpack.c.bf16 %v325, %v324
  %v346 = vpack.c.bf16 %v327, %v326
  %v347 = vpack.c.bf16 %v329, %v328
  %v348 = vpack.c.bf16 %v331, %v330
  %v349 = vpack.c.bf16 %v333, %v332
  %v350 = vld [vmem:[%s3] sm:$0xff]
  %v351 = vld [vmem:[%s3 + $0x8] sm:$0xff]
  %v352 = vld [vmem:[%s3 + $0x10] sm:$0xff]
  %v353 = vld [vmem:[%s3 + $0x18] sm:$0xff]
  %v354 = vld [vmem:[%s4] sm:$0x3]
  %v356 = vlaneseq
  %v357 = vshrl.u32 %v356, 7
  %v358 = vsub.s32 0, %v357
  %v359 = vrot.slane %v354, %v358
  %v360 = vlaneseq
  %v361 = vshrl.u32 %v360, 7
  %v362 = vsub.s32 1, %v361
  %v363 = vrot.slane %v354, %v362
  %v370 = vunpack.c.l.b16 %v350
  %v371 = vunpack.c.h.b16 %v350
  %v372 = vunpack.c.l.b16 %v351
  %v373 = vunpack.c.h.b16 %v351
  %v374 = vunpack.c.l.b16 %v352
  %v375 = vunpack.c.h.b16 %v352
  %v376 = vunpack.c.l.b16 %v353
  %v377 = vunpack.c.h.b16 %v353
  %v378 = vpack.c.b16 %v372, %v370
  %v379 = vpack.c.b16 %v373, %v371
  %v380 = vpack.c.b16 %v376, %v374
  %v381 = vpack.c.b16 %v377, %v375
  %vm386 = vcmask 261120
  %v388 = vsel %vm386, %v334, 0
  %v391 = vsel %vm386, %v335, 0
  %v394 = vsel %vm386, %v336, 0
  %v397 = vsel %vm386, %v337, 0
  %v400 = vsel %vm386, %v338, 0
  %v403 = vsel %vm386, %v339, 0
  %v406 = vsel %vm386, %v340, 0
  %v409 = vsel %vm386, %v341, 0
  %v412 = vsel %vm386, %v342, 0
  %v415 = vsel %vm386, %v343, 0
  %v418 = vsel %vm386, %v344, 0
  %v421 = vsel %vm386, %v345, 0
  %v424 = vsel %vm386, %v346, 0
  %v427 = vsel %vm386, %v347, 0
  %v430 = vsel %vm386, %v348, 0
  %v433 = vsel %vm386, %v349, 0
  %435 = vmatprep.subr.bf16.mxu0 %v379
  %436 = vmatpush1.bf16.msra.mxu0 %v378
  %437 = vmatprep.subr.bf16.mxu0 %v381
  %438 = vmatpush1.bf16.msra.mxu0 %v380
  %439 = vmatprep.subr.bf16.mxu0 0
  %440 = vmatpush1.bf16.msra.mxu0 0
  %441 = vmatprep.subr.bf16.mxu0 0
  %442 = vmatpush1.bf16.msra.mxu0 0
  %443 = vmatprep.subr.bf16.mxu0 0
  %444 = vmatpush1.bf16.msra.mxu0 0
  %445 = vmatprep.subr.bf16.mxu0 0
  %446 = vmatpush1.bf16.msra.mxu0 0
  %447 = vmatprep.subr.bf16.mxu0 0
  %448 = vmatpush1.bf16.msra.mxu0 0
  %449 = vmatprep.subr.bf16.mxu0 0
  %450 = vmatpush1.bf16.msra.mxu0 0
  %451 = vmatprep.subr.bf16.mxu0 0
  %452 = vmatpush1.bf16.msra.mxu0 0
  %453 = vmatprep.subr.bf16.mxu0 0
  %454 = vmatpush1.bf16.msra.mxu0 0
  %455 = vmatprep.subr.bf16.mxu0 0
  %456 = vmatpush1.bf16.msra.mxu0 0
  %457 = vmatprep.subr.bf16.mxu0 0
  %458 = vmatpush1.bf16.msra.mxu0 0
  %459 = vmatprep.subr.bf16.mxu0 0
  %460 = vmatpush1.bf16.msra.mxu0 0
  %461 = vmatprep.subr.bf16.mxu0 0
  %462 = vmatpush1.bf16.msra.mxu0 0
  %463 = vmatprep.subr.bf16.mxu0 0
  %464 = vmatpush1.bf16.msra.mxu0 0
  %465 = vmatprep.subr.bf16.mxu0 0
  %466 = vmatpush1.bf16.msra.mxu0 0
  %467 = vmatprep.mubr.bf16.mxu0 0
  %468 = vmatmul.mubr.bf16.gmra.mrb[0].mxu0 %v388
  %v469 = vpop.f32.mrb[0].mxu0
  %v470 = vadd.f32 %v359, %v469
  %v471 = vpop.f32.mrb[0].mxu0
  %v472 = vadd.f32 %v363, %v471
  %v473 = vpop.f32.mrb[0].mxu0
  %v474 = vadd.f32 %v359, %v473
  %v475 = vpop.f32.mrb[0].mxu0
  %v476 = vadd.f32 %v363, %v475
  %477 = vmatprep.mubr.bf16.mxu0 0
  %478 = vmatmul.mubr.bf16.gmra.mrb[0].mxu0 %v391
  %v479 = vpop.f32.mrb[0].mxu0
  %v480 = vadd.f32 %v359, %v479
  %v481 = vpop.f32.mrb[0].mxu0
  %v482 = vadd.f32 %v363, %v481
  %v483 = vpop.f32.mrb[0].mxu0
  %v484 = vadd.f32 %v359, %v483
  %v485 = vpop.f32.mrb[0].mxu0
  %v486 = vadd.f32 %v363, %v485
  %487 = vmatprep.mubr.bf16.mxu0 0
  %488 = vmatmul.mubr.bf16.gmra.mrb[0].mxu0 %v394
  %v489 = vpop.f32.mrb[0].mxu0
  %v490 = vadd.f32 %v359, %v489
  %v491 = vpop.f32.mrb[0].mxu0
  %v492 = vadd.f32 %v363, %v491
  %v493 = vpop.f32.mrb[0].mxu0
  %v494 = vadd.f32 %v359, %v493
  %v495 = vpop.f32.mrb[0].mxu0
  %v496 = vadd.f32 %v363, %v495
  %497 = vmatprep.mubr.bf16.mxu0 0
  %498 = vmatmul.mubr.bf16.gmra.mrb[0].mxu0 %v397
  %v499 = vpop.f32.mrb[0].mxu0
  %v500 = vadd.f32 %v359, %v499
  %v501 = vpop.f32.mrb[0].mxu0
  %v502 = vadd.f32 %v363, %v501
  %v503 = vpop.f32.mrb[0].mxu0
  %v504 = vadd.f32 %v359, %v503
  %v505 = vpop.f32.mrb[0].mxu0
  %v506 = vadd.f32 %v363, %v505
  %507 = vmatprep.mubr.bf16.mxu0 0
  %508 = vmatmul.mubr.bf16.gmra.mrb[0].mxu0 %v400
  %v509 = vpop.f32.mrb[0].mxu0
  %v510 = vadd.f32 %v359, %v509
  %v511 = vpop.f32.mrb[0].mxu0
  %v512 = vadd.f32 %v363, %v511
  %v513 = vpop.f32.mrb[0].mxu0
  %v514 = vadd.f32 %v359, %v513
  %v515 = vpop.f32.mrb[0].mxu0
  %v516 = vadd.f32 %v363, %v515
  %517 = vmatprep.mubr.bf16.mxu0 0
  %518 = vmatmul.mubr.bf16.gmra.mrb[0].mxu0 %v403
  %v519 = vpop.f32.mrb[0].mxu0
  %v520 = vadd.f32 %v359, %v519
  %v521 = vpop.f32.mrb[0].mxu0
  %v522 = vadd.f32 %v363, %v521
  %v523 = vpop.f32.mrb[0].mxu0
  %v524 = vadd.f32 %v359, %v523
  %v525 = vpop.f32.mrb[0].mxu0
  %v526 = vadd.f32 %v363, %v525
  %527 = vmatprep.mubr.bf16.mxu0 0
  %528 = vmatmul.mubr.bf16.gmra.mrb[0].mxu0 %v406
  %v529 = vpop.f32.mrb[0].mxu0
  %v530 = vadd.f32 %v359, %v529
  %v531 = vpop.f32.mrb[0].mxu0
  %v532 = vadd.f32 %v363, %v531
  %v533 = vpop.f32.mrb[0].mxu0
  %v534 = vadd.f32 %v359, %v533
  %v535 = vpop.f32.mrb[0].mxu0
  %v536 = vadd.f32 %v363, %v535
  %537 = vmatprep.mubr.bf16.mxu0 0
  %538 = vmatmul.mubr.bf16.gmra.mrb[0].mxu0 %v409
  %v539 = vpop.f32.mrb[0].mxu0
  %v540 = vadd.f32 %v359, %v539
  %v541 = vpop.f32.mrb[0].mxu0
  %v542 = vadd.f32 %v363, %v541
  %v543 = vpop.f32.mrb[0].mxu0
  %v544 = vadd.f32 %v359, %v543
  %v545 = vpop.f32.mrb[0].mxu0
  %v546 = vadd.f32 %v363, %v545
  %547 = vmatprep.mubr.bf16.mxu0 0
  %548 = vmatmul.mubr.bf16.gmra.mrb[0].mxu0 %v412
  %v549 = vpop.f32.mrb[0].mxu0
  %v550 = vadd.f32 %v359, %v549
  %v551 = vpop.f32.mrb[0].mxu0
  %v552 = vadd.f32 %v363, %v551
  %v553 = vpop.f32.mrb[0].mxu0
  %v554 = vadd.f32 %v359, %v553
  %v555 = vpop.f32.mrb[0].mxu0
  %v556 = vadd.f32 %v363, %v555
  %557 = vmatprep.mubr.bf16.mxu0 0
  %558 = vmatmul.mubr.bf16.gmra.mrb[0].mxu0 %v415
  %v559 = vpop.f32.mrb[0].mxu0
  %v560 = vadd.f32 %v359, %v559
  %v561 = vpop.f32.mrb[0].mxu0
  %v562 = vadd.f32 %v363, %v561
  %v563 = vpop.f32.mrb[0].mxu0
  %v564 = vadd.f32 %v359, %v563
  %v565 = vpop.f32.mrb[0].mxu0
  %v566 = vadd.f32 %v363, %v565
  %567 = vmatprep.mubr.bf16.mxu0 0
  %568 = vmatmul.mubr.bf16.gmra.mrb[0].mxu0 %v418
  %v569 = vpop.f32.mrb[0].mxu0
  %v570 = vadd.f32 %v359, %v569
  %v571 = vpop.f32.mrb[0].mxu0
  %v572 = vadd.f32 %v363, %v571
  %v573 = vpop.f32.mrb[0].mxu0
  %v574 = vadd.f32 %v359, %v573
  %v575 = vpop.f32.mrb[0].mxu0
  %v576 = vadd.f32 %v363, %v575
  %577 = vmatprep.mubr.bf16.mxu0 0
  %578 = vmatmul.mubr.bf16.gmra.mrb[0].mxu0 %v421
  %v579 = vpop.f32.mrb[0].mxu0
  %v580 = vadd.f32 %v359, %v579
  %v581 = vpop.f32.mrb[0].mxu0
  %v582 = vadd.f32 %v363, %v581
  %v583 = vpop.f32.mrb[0].mxu0
  %v584 = vadd.f32 %v359, %v583
  %v585 = vpop.f32.mrb[0].mxu0
  %v586 = vadd.f32 %v363, %v585
  %587 = vmatprep.mubr.bf16.mxu0 0
  %588 = vmatmul.mubr.bf16.gmra.mrb[0].mxu0 %v424
  %v589 = vpop.f32.mrb[0].mxu0
  %v590 = vadd.f32 %v359, %v589
  %v591 = vpop.f32.mrb[0].mxu0
  %v592 = vadd.f32 %v363, %v591
  %v593 = vpop.f32.mrb[0].mxu0
  %v594 = vadd.f32 %v359, %v593
  %v595 = vpop.f32.mrb[0].mxu0
  %v596 = vadd.f32 %v363, %v595
  %597 = vmatprep.mubr.bf16.mxu0 0
  %598 = vmatmul.mubr.bf16.gmra.mrb[0].mxu0 %v427
  %v599 = vpop.f32.mrb[0].mxu0
  %v600 = vadd.f32 %v359, %v599
  %v601 = vpop.f32.mrb[0].mxu0
  %v602 = vadd.f32 %v363, %v601
  %v603 = vpop.f32.mrb[0].mxu0
  %v604 = vadd.f32 %v359, %v603
  %v605 = vpop.f32.mrb[0].mxu0
  %v606 = vadd.f32 %v363, %v605
  %607 = vmatprep.mubr.bf16.mxu0 0
  %608 = vmatmul.mubr.bf16.gmra.mrb[0].mxu0 %v430
  %v609 = vpop.f32.mrb[0].mxu0
  %v610 = vadd.f32 %v359, %v609
  %v611 = vpop.f32.mrb[0].mxu0
  %v612 = vadd.f32 %v363, %v611
  %v613 = vpop.f32.mrb[0].mxu0
  %v614 = vadd.f32 %v359, %v613
  %v615 = vpop.f32.mrb[0].mxu0
  %v616 = vadd.f32 %v363, %v615
  %617 = vmatprep.mubr.bf16.mxu0 0
  %618 = vmatmul.mubr.bf16.gmra.mrb[0].mxu0 %v433
  %v619 = vpop.f32.mrb[0].mxu0
  %v620 = vadd.f32 %v359, %v619
  %v621 = vpop.f32.mrb[0].mxu0
  %v622 = vadd.f32 %v363, %v621
  %v623 = vpop.f32.mrb[0].mxu0
  %v624 = vadd.f32 %v359, %v623
  %v625 = vpop.f32.mrb[0].mxu0
  %v626 = vadd.f32 %v363, %v625
  %627 = vdwg.mxu0
  %v628 = vld [vmem:[%s5] sm:$0xf]
  %v629 = vld [vmem:[%s5 + $0x4] sm:$0xf]
  %v630 = vld [vmem:[%s5 + $0x8] sm:$0xf]
  %v631 = vld [vmem:[%s5 + $0xc] sm:$0xf]
  %v632 = vld [vmem:[%s6] sm:$0x1]
  %v634 = vlaneseq
  %v635 = vshrl.u32 %v634, 7
  %v636 = vsub.s32 0, %v635
  %v637 = vrot.slane %v632, %v636
  %v643 = vunpack.c.l.b16 %v628
  %v644 = vunpack.c.l.b16 %v629
  %v645 = vunpack.c.l.b16 %v630
  %v646 = vunpack.c.l.b16 %v631
  %v647 = vpack.c.b16 %v644, %v643
  %v648 = vpack.c.b16 %v646, %v645
  %651 = vmatprep.subr.bf16.mxu0 0
  %652 = vmatpush1.bf16.msra.mxu0 %v647
  %653 = vmatprep.subr.bf16.mxu0 0
  %654 = vmatpush1.bf16.msra.mxu0 %v648
  %655 = vmatprep.subr.bf16.mxu0 0
  %656 = vmatpush1.bf16.msra.mxu0 0
  %657 = vmatprep.subr.bf16.mxu0 0
  %658 = vmatpush1.bf16.msra.mxu0 0
  %659 = vmatprep.subr.bf16.mxu0 0
  %660 = vmatpush1.bf16.msra.mxu0 0
  %661 = vmatprep.subr.bf16.mxu0 0
  %662 = vmatpush1.bf16.msra.mxu0 0
  %663 = vmatprep.subr.bf16.mxu0 0
  %664 = vmatpush1.bf16.msra.mxu0 0
  %665 = vmatprep.subr.bf16.mxu0 0
  %666 = vmatpush1.bf16.msra.mxu0 0
  %667 = vmatprep.subr.bf16.mxu0 0
  %668 = vmatpush1.bf16.msra.mxu0 0
  %669 = vmatprep.subr.bf16.mxu0 0
  %670 = vmatpush1.bf16.msra.mxu0 0
  %671 = vmatprep.subr.bf16.mxu0 0
  %672 = vmatpush1.bf16.msra.mxu0 0
  %673 = vmatprep.subr.bf16.mxu0 0
  %674 = vmatpush1.bf16.msra.mxu0 0
  %675 = vmatprep.subr.bf16.mxu0 0
  %676 = vmatpush1.bf16.msra.mxu0 0
  %677 = vmatprep.subr.bf16.mxu0 0
  %678 = vmatpush1.bf16.msra.mxu0 0
  %679 = vmatprep.subr.bf16.mxu0 0
  %680 = vmatpush1.bf16.msra.mxu0 0
  %681 = vmatprep.subr.bf16.mxu0 0
  %682 = vmatpush1.bf16.msra.mxu0 0
  %683 = vmatprep.mubr.bf16.mxu0 0
  %684 = vmatmul.mubr.bf16.gmra.mrb[0].mxu0 %v388
  %v685 = vpop.f32.mrb[0].mxu0
  %v686 = vadd.f32 %v637, %v685
  %v687 = vpop.f32.mrb[0].mxu0
  %v688 = vpop.f32.mrb[0].mxu0
  %v689 = vadd.f32 %v637, %v688
  %v690 = vpop.f32.mrb[0].mxu0
  %691 = vmatprep.mubr.bf16.mxu0 0
  %692 = vmatmul.mubr.bf16.gmra.mrb[0].mxu0 %v391
  %v693 = vpop.f32.mrb[0].mxu0
  %v694 = vadd.f32 %v637, %v693
  %v695 = vpop.f32.mrb[0].mxu0
  %v696 = vpop.f32.mrb[0].mxu0
  %v697 = vadd.f32 %v637, %v696
  %v698 = vpop.f32.mrb[0].mxu0
  %699 = vmatprep.mubr.bf16.mxu0 0
  %700 = vmatmul.mubr.bf16.gmra.mrb[0].mxu0 %v394
  %v701 = vpop.f32.mrb[0].mxu0
  %v702 = vadd.f32 %v637, %v701
  %v703 = vpop.f32.mrb[0].mxu0
  %v704 = vpop.f32.mrb[0].mxu0
  %v705 = vadd.f32 %v637, %v704
  %v706 = vpop.f32.mrb[0].mxu0
  %707 = vmatprep.mubr.bf16.mxu0 0
  %708 = vmatmul.mubr.bf16.gmra.mrb[0].mxu0 %v397
  %v709 = vpop.f32.mrb[0].mxu0
  %v710 = vadd.f32 %v637, %v709
  %v711 = vpop.f32.mrb[0].mxu0
  %v712 = vpop.f32.mrb[0].mxu0
  %v713 = vadd.f32 %v637, %v712
  %v714 = vpop.f32.mrb[0].mxu0
  %715 = vmatprep.mubr.bf16.mxu0 0
  %716 = vmatmul.mubr.bf16.gmra.mrb[0].mxu0 %v400
  %v717 = vpop.f32.mrb[0].mxu0
  %v718 = vadd.f32 %v637, %v717
  %v719 = vpop.f32.mrb[0].mxu0
  %v720 = vpop.f32.mrb[0].mxu0
  %v721 = vadd.f32 %v637, %v720
  %v722 = vpop.f32.mrb[0].mxu0
  %723 = vmatprep.mubr.bf16.mxu0 0
  %724 = vmatmul.mubr.bf16.gmra.mrb[0].mxu0 %v403
  %v725 = vpop.f32.mrb[0].mxu0
  %v726 = vadd.f32 %v637, %v725
  %v727 = vpop.f32.mrb[0].mxu0
  %v728 = vpop.f32.mrb[0].mxu0
  %v729 = vadd.f32 %v637, %v728
  %v730 = vpop.f32.mrb[0].mxu0
  %731 = vmatprep.mubr.bf16.mxu0 0
  %732 = vmatmul.mubr.bf16.gmra.mrb[0].mxu0 %v406
  %v733 = vpop.f32.mrb[0].mxu0
  %v734 = vadd.f32 %v637, %v733
  %v735 = vpop.f32.mrb[0].mxu0
  %v736 = vpop.f32.mrb[0].mxu0
  %v737 = vadd.f32 %v637, %v736
  %v738 = vpop.f32.mrb[0].mxu0
  %739 = vmatprep.mubr.bf16.mxu0 0
  %740 = vmatmul.mubr.bf16.gmra.mrb[0].mxu0 %v409
  %v741 = vpop.f32.mrb[0].mxu0
  %v742 = vadd.f32 %v637, %v741
  %v743 = vpop.f32.mrb[0].mxu0
  %v744 = vpop.f32.mrb[0].mxu0
  %v745 = vadd.f32 %v637, %v744
  %v746 = vpop.f32.mrb[0].mxu0
  %747 = vmatprep.mubr.bf16.mxu0 0
  %748 = vmatmul.mubr.bf16.gmra.mrb[0].mxu0 %v412
  %v749 = vpop.f32.mrb[0].mxu0
  %v750 = vadd.f32 %v637, %v749
  %v751 = vpop.f32.mrb[0].mxu0
  %v752 = vpop.f32.mrb[0].mxu0
  %v753 = vadd.f32 %v637, %v752
  %v754 = vpop.f32.mrb[0].mxu0
  %755 = vmatprep.mubr.bf16.mxu0 0
  %756 = vmatmul.mubr.bf16.gmra.mrb[0].mxu0 %v415
  %v757 = vpop.f32.mrb[0].mxu0
  %v758 = vadd.f32 %v637, %v757
  %v759 = vpop.f32.mrb[0].mxu0
  %v760 = vpop.f32.mrb[0].mxu0
  %v761 = vadd.f32 %v637, %v760
  %v762 = vpop.f32.mrb[0].mxu0
  %763 = vmatprep.mubr.bf16.mxu0 0
  %764 = vmatmul.mubr.bf16.gmra.mrb[0].mxu0 %v418
  %v765 = vpop.f32.mrb[0].mxu0
  %v766 = vadd.f32 %v637, %v765
  %v767 = vpop.f32.mrb[0].mxu0
  %v768 = vpop.f32.mrb[0].mxu0
  %v769 = vadd.f32 %v637, %v768
  %v770 = vpop.f32.mrb[0].mxu0
  %771 = vmatprep.mubr.bf16.mxu0 0
  %772 = vmatmul.mubr.bf16.gmra.mrb[0].mxu0 %v421
  %v773 = vpop.f32.mrb[0].mxu0
  %v774 = vadd.f32 %v637, %v773
  %v775 = vpop.f32.mrb[0].mxu0
  %v776 = vpop.f32.mrb[0].mxu0
  %v777 = vadd.f32 %v637, %v776
  %v778 = vpop.f32.mrb[0].mxu0
  %779 = vmatprep.mubr.bf16.mxu0 0
  %780 = vmatmul.mubr.bf16.gmra.mrb[0].mxu0 %v424
  %v781 = vpop.f32.mrb[0].mxu0
  %v782 = vadd.f32 %v637, %v781
  %v783 = vpop.f32.mrb[0].mxu0
  %v784 = vpop.f32.mrb[0].mxu0
  %v785 = vadd.f32 %v637, %v784
  %v786 = vpop.f32.mrb[0].mxu0
  %787 = vmatprep.mubr.bf16.mxu0 0
  %788 = vmatmul.mubr.bf16.gmra.mrb[0].mxu0 %v427
  %v789 = vpop.f32.mrb[0].mxu0
  %v790 = vadd.f32 %v637, %v789
  %v791 = vpop.f32.mrb[0].mxu0
  %v792 = vpop.f32.mrb[0].mxu0
  %v793 = vadd.f32 %v637, %v792
  %v794 = vpop.f32.mrb[0].mxu0
  %795 = vmatprep.mubr.bf16.mxu0 0
  %796 = vmatmul.mubr.bf16.gmra.mrb[0].mxu0 %v430
  %v797 = vpop.f32.mrb[0].mxu0
  %v798 = vadd.f32 %v637, %v797
  %v799 = vpop.f32.mrb[0].mxu0
  %v800 = vpop.f32.mrb[0].mxu0
  %v801 = vadd.f32 %v637, %v800
  %v802 = vpop.f32.mrb[0].mxu0
  %803 = vmatprep.mubr.bf16.mxu0 0
  %804 = vmatmul.mubr.bf16.gmra.mrb[0].mxu0 %v433
  %v805 = vpop.f32.mrb[0].mxu0
  %v806 = vadd.f32 %v637, %v805
  %v807 = vpop.f32.mrb[0].mxu0
  %v808 = vpop.f32.mrb[0].mxu0
  %v809 = vadd.f32 %v637, %v808
  %v810 = vpop.f32.mrb[0].mxu0
  %811 = vdwg.mxu0
  %v812 = vpack.c.bf16 %v474, %v470
  %v813 = vpack.c.bf16 %v476, %v472
  %v814 = vpack.c.bf16 %v484, %v480
  %v815 = vpack.c.bf16 %v486, %v482
  %v816 = vpack.c.bf16 %v494, %v490
  %v817 = vpack.c.bf16 %v496, %v492
  %v818 = vpack.c.bf16 %v504, %v500
  %v819 = vpack.c.bf16 %v506, %v502
  %v820 = vpack.c.bf16 %v514, %v510
  %v821 = vpack.c.bf16 %v516, %v512
  %v822 = vpack.c.bf16 %v524, %v520
  %v823 = vpack.c.bf16 %v526, %v522
  %v824 = vpack.c.bf16 %v534, %v530
  %v825 = vpack.c.bf16 %v536, %v532
  %v826 = vpack.c.bf16 %v544, %v540
  %v827 = vpack.c.bf16 %v546, %v542
  %v828 = vpack.c.bf16 %v554, %v550
  %v829 = vpack.c.bf16 %v556, %v552
  %v830 = vpack.c.bf16 %v564, %v560
  %v831 = vpack.c.bf16 %v566, %v562
  %v832 = vpack.c.bf16 %v574, %v570
  %v833 = vpack.c.bf16 %v576, %v572
  %v834 = vpack.c.bf16 %v584, %v580
  %v835 = vpack.c.bf16 %v586, %v582
  %v836 = vpack.c.bf16 %v594, %v590
  %v837 = vpack.c.bf16 %v596, %v592
  %v838 = vpack.c.bf16 %v604, %v600
  %v839 = vpack.c.bf16 %v606, %v602
  %v840 = vpack.c.bf16 %v614, %v610
  %v841 = vpack.c.bf16 %v616, %v612
  %v842 = vpack.c.bf16 %v624, %v620
  %v843 = vpack.c.bf16 %v626, %v622
  %v876 = vunpack.c.l.b16 %v812
  %v877 = vunpack.c.l.b16 %v813
  %v878 = vunpack.c.h.b16 %v812
  %v879 = vunpack.c.h.b16 %v813
  %v880 = vunpack.c.l.b16 %v814
  %v881 = vunpack.c.l.b16 %v815
  %v882 = vunpack.c.h.b16 %v814
  %v883 = vunpack.c.h.b16 %v815
  %v884 = vunpack.c.l.b16 %v816
  %v885 = vunpack.c.l.b16 %v817
  %v886 = vunpack.c.h.b16 %v816
  %v887 = vunpack.c.h.b16 %v817
  %v888 = vunpack.c.l.b16 %v818
  %v889 = vunpack.c.l.b16 %v819
  %v890 = vunpack.c.h.b16 %v818
  %v891 = vunpack.c.h.b16 %v819
  %v892 = vunpack.c.l.b16 %v820
  %v893 = vunpack.c.l.b16 %v821
  %v894 = vunpack.c.h.b16 %v820
  %v895 = vunpack.c.h.b16 %v821
  %v896 = vunpack.c.l.b16 %v822
  %v897 = vunpack.c.l.b16 %v823
  %v898 = vunpack.c.h.b16 %v822
  %v899 = vunpack.c.h.b16 %v823
  %v900 = vunpack.c.l.b16 %v824
  %v901 = vunpack.c.l.b16 %v825
  %v902 = vunpack.c.h.b16 %v824
  %v903 = vunpack.c.h.b16 %v825
  %v904 = vunpack.c.l.b16 %v826
  %v905 = vunpack.c.l.b16 %v827
  %v906 = vunpack.c.h.b16 %v826
  %v907 = vunpack.c.h.b16 %v827
  %v908 = vunpack.c.l.b16 %v828
  %v909 = vunpack.c.l.b16 %v829
  %v910 = vunpack.c.h.b16 %v828
  %v911 = vunpack.c.h.b16 %v829
  %v912 = vunpack.c.l.b16 %v830
  %v913 = vunpack.c.l.b16 %v831
  %v914 = vunpack.c.h.b16 %v830
  %v915 = vunpack.c.h.b16 %v831
  %v916 = vunpack.c.l.b16 %v832
  %v917 = vunpack.c.l.b16 %v833
  %v918 = vunpack.c.h.b16 %v832
  %v919 = vunpack.c.h.b16 %v833
  %v920 = vunpack.c.l.b16 %v834
  %v921 = vunpack.c.l.b16 %v835
  %v922 = vunpack.c.h.b16 %v834
  %v923 = vunpack.c.h.b16 %v835
  %v924 = vunpack.c.l.b16 %v836
  %v925 = vunpack.c.l.b16 %v837
  %v926 = vunpack.c.h.b16 %v836
  %v927 = vunpack.c.h.b16 %v837
  %v928 = vunpack.c.l.b16 %v838
  %v929 = vunpack.c.l.b16 %v839
  %v930 = vunpack.c.h.b16 %v838
  %v931 = vunpack.c.h.b16 %v839
  %v932 = vunpack.c.l.b16 %v840
  %v933 = vunpack.c.l.b16 %v841
  %v934 = vunpack.c.h.b16 %v840
  %v935 = vunpack.c.h.b16 %v841
  %v936 = vunpack.c.l.b16 %v842
  %v937 = vunpack.c.l.b16 %v843
  %v938 = vunpack.c.h.b16 %v842
  %v939 = vunpack.c.h.b16 %v843
  %v940 = vpack.c.b16 %v877, %v876
  %v941 = vpack.c.b16 %v879, %v878
  %v942 = vpack.c.b16 %v881, %v880
  %v943 = vpack.c.b16 %v883, %v882
  %v944 = vpack.c.b16 %v885, %v884
  %v945 = vpack.c.b16 %v887, %v886
  %v946 = vpack.c.b16 %v889, %v888
  %v947 = vpack.c.b16 %v891, %v890
  %v948 = vpack.c.b16 %v893, %v892
  %v949 = vpack.c.b16 %v895, %v894
  %v950 = vpack.c.b16 %v897, %v896
  %v951 = vpack.c.b16 %v899, %v898
  %v952 = vpack.c.b16 %v901, %v900
  %v953 = vpack.c.b16 %v903, %v902
  %v954 = vpack.c.b16 %v905, %v904
  %v955 = vpack.c.b16 %v907, %v906
  %v956 = vpack.c.b16 %v909, %v908
  %v957 = vpack.c.b16 %v911, %v910
  %v958 = vpack.c.b16 %v913, %v912
  %v959 = vpack.c.b16 %v915, %v914
  %v960 = vpack.c.b16 %v917, %v916
  %v961 = vpack.c.b16 %v919, %v918
  %v962 = vpack.c.b16 %v921, %v920
  %v963 = vpack.c.b16 %v923, %v922
  %v964 = vpack.c.b16 %v925, %v924
  %v965 = vpack.c.b16 %v927, %v926
  %v966 = vpack.c.b16 %v929, %v928
  %v967 = vpack.c.b16 %v931, %v930
  %v968 = vpack.c.b16 %v933, %v932
  %v969 = vpack.c.b16 %v935, %v934
  %v970 = vpack.c.b16 %v937, %v936
  %v971 = vpack.c.b16 %v939, %v938
  %1004 = vst [vmem:[%s7] sm:$0xff] %v940
  %1005 = vst [vmem:[%s7 + $0x8] sm:$0xff] %v941
  %1006 = vst [vmem:[%s7 + $0x10] sm:$0xff] %v942
  %1007 = vst [vmem:[%s7 + $0x18] sm:$0xff] %v943
  %1008 = vst [vmem:[%s7 + $0x20] sm:$0xff] %v944
  %1009 = vst [vmem:[%s7 + $0x28] sm:$0xff] %v945
  %1010 = vst [vmem:[%s7 + $0x30] sm:$0xff] %v946
  %1011 = vst [vmem:[%s7 + $0x38] sm:$0xff] %v947
  %1012 = vst [vmem:[%s7 + $0x40] sm:$0xff] %v948
  %1013 = vst [vmem:[%s7 + $0x48] sm:$0xff] %v949
  %1014 = vst [vmem:[%s7 + $0x50] sm:$0xff] %v950
  %1015 = vst [vmem:[%s7 + $0x58] sm:$0xff] %v951
  %1016 = vst [vmem:[%s7 + $0x60] sm:$0xff] %v952
  %1017 = vst [vmem:[%s7 + $0x68] sm:$0xff] %v953
  %1018 = vst [vmem:[%s7 + $0x70] sm:$0xff] %v954
  %1019 = vst [vmem:[%s7 + $0x78] sm:$0xff] %v955
  %1020 = vst [vmem:[%s7 + $0x80] sm:$0xff] %v956
  %1021 = vst [vmem:[%s7 + $0x88] sm:$0xff] %v957
  %1022 = vst [vmem:[%s7 + $0x90] sm:$0xff] %v958
  %1023 = vst [vmem:[%s7 + $0x98] sm:$0xff] %v959
  %1024 = vst [vmem:[%s7 + $0xa0] sm:$0xff] %v960
  %1025 = vst [vmem:[%s7 + $0xa8] sm:$0xff] %v961
  %1026 = vst [vmem:[%s7 + $0xb0] sm:$0xff] %v962
  %1027 = vst [vmem:[%s7 + $0xb8] sm:$0xff] %v963
  %1028 = vst [vmem:[%s7 + $0xc0] sm:$0xff] %v964
  %1029 = vst [vmem:[%s7 + $0xc8] sm:$0xff] %v965
  %1030 = vst [vmem:[%s7 + $0xd0] sm:$0xff] %v966
  %1031 = vst [vmem:[%s7 + $0xd8] sm:$0xff] %v967
  %1032 = vst [vmem:[%s7 + $0xe0] sm:$0xff] %v968
  %1033 = vst [vmem:[%s7 + $0xe8] sm:$0xff] %v969
  %1034 = vst [vmem:[%s7 + $0xf0] sm:$0xff] %v970
  %1035 = vst [vmem:[%s7 + $0xf8] sm:$0xff] %v971
  %v1036 = vpack.c.bf16 %v689, %v686
  %v1037 = vpack.c.bf16 %v697, %v694
  %v1038 = vpack.c.bf16 %v705, %v702
  %v1039 = vpack.c.bf16 %v713, %v710
  %v1040 = vpack.c.bf16 %v721, %v718
  %v1041 = vpack.c.bf16 %v729, %v726
  %v1042 = vpack.c.bf16 %v737, %v734
  %v1043 = vpack.c.bf16 %v745, %v742
  %v1044 = vpack.c.bf16 %v753, %v750
  %v1045 = vpack.c.bf16 %v761, %v758
  %v1046 = vpack.c.bf16 %v769, %v766
  %v1047 = vpack.c.bf16 %v777, %v774
  %v1048 = vpack.c.bf16 %v785, %v782
  %v1049 = vpack.c.bf16 %v793, %v790
  %v1050 = vpack.c.bf16 %v801, %v798
  %v1051 = vpack.c.bf16 %v809, %v806
  %v1068 = vunpack.c.l.b16 %v1036
  %v1069 = vunpack.c.h.b16 %v1036
  %v1070 = vunpack.c.l.b16 %v1037
  %v1071 = vunpack.c.h.b16 %v1037
  %v1072 = vunpack.c.l.b16 %v1038
  %v1073 = vunpack.c.h.b16 %v1038
  %v1074 = vunpack.c.l.b16 %v1039
  %v1075 = vunpack.c.h.b16 %v1039
  %v1076 = vunpack.c.l.b16 %v1040
  %v1077 = vunpack.c.h.b16 %v1040
  %v1078 = vunpack.c.l.b16 %v1041
  %v1079 = vunpack.c.h.b16 %v1041
  %v1080 = vunpack.c.l.b16 %v1042
  %v1081 = vunpack.c.h.b16 %v1042
  %v1082 = vunpack.c.l.b16 %v1043
  %v1083 = vunpack.c.h.b16 %v1043
  %v1084 = vunpack.c.l.b16 %v1044
  %v1085 = vunpack.c.h.b16 %v1044
  %v1086 = vunpack.c.l.b16 %v1045
  %v1087 = vunpack.c.h.b16 %v1045
  %v1088 = vunpack.c.l.b16 %v1046
  %v1089 = vunpack.c.h.b16 %v1046
  %v1090 = vunpack.c.l.b16 %v1047
  %v1091 = vunpack.c.h.b16 %v1047
  %v1092 = vunpack.c.l.b16 %v1048
  %v1093 = vunpack.c.h.b16 %v1048
  %v1094 = vunpack.c.l.b16 %v1049
  %v1095 = vunpack.c.h.b16 %v1049
  %v1096 = vunpack.c.l.b16 %v1050
  %v1097 = vunpack.c.h.b16 %v1050
  %v1098 = vunpack.c.l.b16 %v1051
  %v1099 = vunpack.c.h.b16 %v1051
  %v1100 = vpack.c.b16 %v1068, %v1068
  %v1101 = vpack.c.b16 %v1069, %v1069
  %v1102 = vpack.c.b16 %v1070, %v1070
  %v1103 = vpack.c.b16 %v1071, %v1071
  %v1104 = vpack.c.b16 %v1072, %v1072
  %v1105 = vpack.c.b16 %v1073, %v1073
  %v1106 = vpack.c.b16 %v1074, %v1074
  %v1107 = vpack.c.b16 %v1075, %v1075
  %v1108 = vpack.c.b16 %v1076, %v1076
  %v1109 = vpack.c.b16 %v1077, %v1077
  %v1110 = vpack.c.b16 %v1078, %v1078
  %v1111 = vpack.c.b16 %v1079, %v1079
  %v1112 = vpack.c.b16 %v1080, %v1080
  %v1113 = vpack.c.b16 %v1081, %v1081
  %v1114 = vpack.c.b16 %v1082, %v1082
  %v1115 = vpack.c.b16 %v1083, %v1083
  %v1116 = vpack.c.b16 %v1084, %v1084
  %v1117 = vpack.c.b16 %v1085, %v1085
  %v1118 = vpack.c.b16 %v1086, %v1086
  %v1119 = vpack.c.b16 %v1087, %v1087
  %v1120 = vpack.c.b16 %v1088, %v1088
  %v1121 = vpack.c.b16 %v1089, %v1089
  %v1122 = vpack.c.b16 %v1090, %v1090
  %v1123 = vpack.c.b16 %v1091, %v1091
  %v1124 = vpack.c.b16 %v1092, %v1092
  %v1125 = vpack.c.b16 %v1093, %v1093
  %v1126 = vpack.c.b16 %v1094, %v1094
  %v1127 = vpack.c.b16 %v1095, %v1095
  %v1128 = vpack.c.b16 %v1096, %v1096
  %v1129 = vpack.c.b16 %v1097, %v1097
  %v1130 = vpack.c.b16 %v1098, %v1098
  %v1131 = vpack.c.b16 %v1099, %v1099
  %vm1164 = vcmask 125952
  %1165 = vst.msk [vmem:[%s8] sm:$0xf] %vm1164, %v1100
  %1166 = vst.msk [vmem:[%s8 + $0x4] sm:$0xf] %vm1164, %v1101
  %1167 = vst.msk [vmem:[%s8 + $0x8] sm:$0xf] %vm1164, %v1102
  %1168 = vst.msk [vmem:[%s8 + $0xc] sm:$0xf] %vm1164, %v1103
  %1169 = vst.msk [vmem:[%s8 + $0x10] sm:$0xf] %vm1164, %v1104
  %1170 = vst.msk [vmem:[%s8 + $0x14] sm:$0xf] %vm1164, %v1105
  %1171 = vst.msk [vmem:[%s8 + $0x18] sm:$0xf] %vm1164, %v1106
  %1172 = vst.msk [vmem:[%s8 + $0x1c] sm:$0xf] %vm1164, %v1107
  %1173 = vst.msk [vmem:[%s8 + $0x20] sm:$0xf] %vm1164, %v1108
  %1174 = vst.msk [vmem:[%s8 + $0x24] sm:$0xf] %vm1164, %v1109
  %1175 = vst.msk [vmem:[%s8 + $0x28] sm:$0xf] %vm1164, %v1110
  %1176 = vst.msk [vmem:[%s8 + $0x2c] sm:$0xf] %vm1164, %v1111
  %1177 = vst.msk [vmem:[%s8 + $0x30] sm:$0xf] %vm1164, %v1112
  %1178 = vst.msk [vmem:[%s8 + $0x34] sm:$0xf] %vm1164, %v1113
  %1179 = vst.msk [vmem:[%s8 + $0x38] sm:$0xf] %vm1164, %v1114
  %1180 = vst.msk [vmem:[%s8 + $0x3c] sm:$0xf] %vm1164, %v1115
  %1181 = vst.msk [vmem:[%s8 + $0x40] sm:$0xf] %vm1164, %v1116
  %1182 = vst.msk [vmem:[%s8 + $0x44] sm:$0xf] %vm1164, %v1117
  %1183 = vst.msk [vmem:[%s8 + $0x48] sm:$0xf] %vm1164, %v1118
  %1184 = vst.msk [vmem:[%s8 + $0x4c] sm:$0xf] %vm1164, %v1119
  %1185 = vst.msk [vmem:[%s8 + $0x50] sm:$0xf] %vm1164, %v1120
  %1186 = vst.msk [vmem:[%s8 + $0x54] sm:$0xf] %vm1164, %v1121
  %1187 = vst.msk [vmem:[%s8 + $0x58] sm:$0xf] %vm1164, %v1122
  %1188 = vst.msk [vmem:[%s8 + $0x5c] sm:$0xf] %vm1164, %v1123
  %1189 = vst.msk [vmem:[%s8 + $0x60] sm:$0xf] %vm1164, %v1124
  %1190 = vst.msk [vmem:[%s8 + $0x64] sm:$0xf] %vm1164, %v1125
  %1191 = vst.msk [vmem:[%s8 + $0x68] sm:$0xf] %vm1164, %v1126
  %1192 = vst.msk [vmem:[%s8 + $0x6c] sm:$0xf] %vm1164, %v1127
  %1193 = vst.msk [vmem:[%s8 + $0x70] sm:$0xf] %vm1164, %v1128
  %1194 = vst.msk [vmem:[%s8 + $0x74] sm:$0xf] %vm1164, %v1129
  %1195 = vst.msk [vmem:[%s8 + $0x78] sm:$0xf] %vm1164, %v1130
  %1196 = vst.msk [vmem:[%s8 + $0x7c] sm:$0xf] %vm1164, %v1131
  // Predicated region
  $region30: #{metanet_flat_v1.1} parent=0 // pred_check
    _
  $region31: #{metanet_flat_v1.1} parent=0 // pred_check_branch
    %1198 = sbr.rel (0) target = $region33
  $region32: #{metanet_flat_v1.1} parent=0 // pred_region
    _
  $region33: #{metanet_flat_v1.1} parent=0 // pred_fallthru
    _
  // Predicated region
  $region34: #{metanet_flat_v1.1} parent=0 // pred_check
    _
  $region35: #{metanet_flat_v1.1} parent=0 // pred_check_branch
    %1200 = sbr.rel (0) target = $region37
  $region36: #{metanet_flat_v1.1} parent=0 // pred_region
    _
  $region37: #{metanet_flat_v1.1} parent=0 // pred_fallthru
    _
  // Predicated region
  $region38: #{metanet_flat_v1.1} parent=0 // pred_check
    _
  $region39: #{metanet_flat_v1.1} parent=0 // pred_check_branch
    %1202 = sbr.rel (0) target = $region41
  $region40: #{metanet_flat_v1.1} parent=0 // pred_region
    _
  $region41: #{metanet_flat_v1.1} parent=0 // pred_fallthru
    _
  // Predicated region
  $region42: #{metanet_flat_v1.1} parent=0 // pred_check
    _
  $region43: #{metanet_flat_v1.1} parent=0 // pred_check_branch
    %1204 = sbr.rel (0) target = $region45
  $region44: #{metanet_flat_v1.1} parent=0 // pred_region
    _
  $region45: #{metanet_flat_v1.1} parent=0 // pred_fallthru
    _

</llo_original>
